<compile_context>
chip_gen: v7x
topology: tpu7x:2x2x1
jax: 0.10.0
libtpu: 0.0.40
codegen_flags: <defaults>
</compile_context>

<pallas_src>
import jax
import jax.numpy as jnp
from jax.experimental import pallas as pl
from jax.experimental.pallas import tpu as pltpu

N_FEATURES = 32          # len(categorical_features) in the PyTorch script
H1, H2, OUT = 64, 32, 1
BN_EPS = 1e-5
LANES = 128              # TPU lane width; H1/H2 are zero-padded up to this

# ---- packed parameter slab layout: shape (N_ROWS, LANES) ----
#   rows   0: 32, lanes 0:64  -> W1 (32, 64)                (rest zero)
#   rows  32:160, lanes 0:32  -> W2 (64, 32) in rows 32:96  (rest zero)
#   row  160 -> gamma1 (lanes 0:64)   row 161 -> beta1 (lanes 0:64)
#   row  162 -> gamma2 (lanes 0:32)   row 163 -> beta2 (lanes 0:32)
#   row  164 -> w3     (lanes 0:32)   row 165 lane 0 -> b3
#   rows 166:168 -> zero pad (sublane multiple of 8)
ROWS_W1 = N_FEATURES                 # 32
ROW_W2 = ROWS_W1                     # 32
ROW_TAIL = ROW_W2 + LANES            # 160
R_G1, R_BE1, R_G2, R_BE2, R_W3, R_B3 = 0, 1, 2, 3, 4, 5
N_ROWS = ROW_TAIL + 8                # 168


def _bn_relu_train(h, gamma, beta):
    """Training-mode BatchNorm1d (biased batch stats) fused with ReLU.
    Padded lanes carry gamma = 0 -> output exactly 0 there."""
    mean = jnp.mean(h, axis=0, keepdims=True)
    var = jnp.mean(h * h, axis=0, keepdims=True) - mean * mean
    scale = jax.lax.rsqrt(var + BN_EPS) * gamma
    shift = beta - mean * scale
    return jnp.maximum(h * scale + shift, 0.0)


def linear_model_kernel(x_ref, p_ref, o_ref):
    x = x_ref[...]                                  # (B, 32)

    w1 = p_ref[0:ROWS_W1, :]                        # (32, 128)  cols 0:64 real
    w2 = p_ref[ROW_W2:ROW_TAIL, :]                  # (128, 128) rows 0:64 / cols 0:32 real
    tail = p_ref[ROW_TAIL:N_ROWS, :]                # (8, 128)   one vreg of small params

    g1, be1 = tail[R_G1:R_G1 + 1, :], tail[R_BE1:R_BE1 + 1, :]
    g2, be2 = tail[R_G2:R_G2 + 1, :], tail[R_BE2:R_BE2 + 1, :]
    w3 = tail[R_W3:R_W3 + 1, :]                     # (1, 128)  lanes 0:32 real
    b3 = tail[R_B3:R_B3 + 1, 0:1]                   # (1, 1)

    # layer1: (B,32) @ (32,128).  Linear bias omitted (cancelled by BN mean-sub).
    h1 = jnp.dot(x, w1, preferred_element_type=jnp.float32)
    h1 = _bn_relu_train(h1, g1, be1)                # (B, 128), lanes 64:128 == 0

    # layer2: (B,128) @ (128,128).  Bias likewise omitted.
    h2 = jnp.dot(h1, w2, preferred_element_type=jnp.float32)
    h2 = _bn_relu_train(h2, g2, be2)                # (B, 128), lanes 32:128 == 0

    # layer3: single output column -> VPU multiply + lane reduce (no MXU).
    y = jnp.sum(h2 * w3, axis=-1, keepdims=True) + b3
    o_ref[...] = jax.nn.sigmoid(y)


def pack_params(w1, w2, w3, b3, g1, be1, g2, be2):
    p = jnp.zeros((N_ROWS, LANES), jnp.float32)
    p = p.at[:ROWS_W1, :H1].set(w1)                           # W1 (32,64)
    p = p.at[ROW_W2:ROW_W2 + H1, :H2].set(w2)                 # W2 (64,32)
    p = p.at[ROW_TAIL + R_G1, :H1].set(g1)
    p = p.at[ROW_TAIL + R_BE1, :H1].set(be1)
    p = p.at[ROW_TAIL + R_G2, :H2].set(g2)
    p = p.at[ROW_TAIL + R_BE2, :H2].set(be2)
    p = p.at[ROW_TAIL + R_W3, :H2].set(w3[:, 0])              # w3 as a row
    p = p.at[ROW_TAIL + R_B3, 0].set(b3[0])
    return p


def init_params(key):
    """Mimics nn.Linear default init (uniform +/- 1/sqrt(fan_in)) and
    BatchNorm1d default (gamma=1, beta=0).  b1/b2 are generated only for the
    pure-JAX reference (they are mathematically inert before training-mode BN
    and are not packed into the kernel operand)."""
    ks = jax.random.split(key, 6)

    def lin_w(k, fan_in, fan_out):
        bound = 1.0 / jnp.sqrt(fan_in)
        return jax.random.uniform(k, (fan_in, fan_out), jnp.float32, -bound, bound)

    def lin_b(k, fan_in, fan_out):
        bound = 1.0 / jnp.sqrt(fan_in)
        return jax.random.uniform(k, (fan_out,), jnp.float32, -bound, bound)

    raw = dict(
        w1=lin_w(ks[0], N_FEATURES, H1), b1=lin_b(ks[1], N_FEATURES, H1),
        w2=lin_w(ks[2], H1, H2),         b2=lin_b(ks[3], H1, H2),
        w3=lin_w(ks[4], H2, OUT),        b3=lin_b(ks[5], H2, OUT),
        g1=jnp.ones((H1,), jnp.float32), be1=jnp.zeros((H1,), jnp.float32),
        g2=jnp.ones((H2,), jnp.float32), be2=jnp.zeros((H2,), jnp.float32),
    )
    packed = pack_params(raw["w1"], raw["w2"], raw["w3"], raw["b3"],
                         raw["g1"], raw["be1"], raw["g2"], raw["be2"])
    return raw, packed


@jax.jit
def linear_model_forward(x, packed):
    B = x.shape[0]
    vmem = pl.BlockSpec(memory_space=pltpu.MemorySpace.VMEM)
    return pl.pallas_call(
        linear_model_kernel,
        out_shape=jax.ShapeDtypeStruct((B, OUT), jnp.float32),
        in_specs=[vmem, vmem],
        out_specs=vmem,
    )(x, packed)


def reference_forward(x, raw):
    """Pure-JAX equivalent of the PyTorch module in training mode
    (includes b1/b2, verifying they are indeed cancelled by BN)."""
    def bn(h, g, be):
        m = jnp.mean(h, axis=0)
        v = jnp.var(h, axis=0)                     # biased, as PyTorch uses for normalization
        return (h - m) / jnp.sqrt(v + BN_EPS) * g + be

    h = jnp.maximum(bn(x @ raw["w1"] + raw["b1"], raw["g1"], raw["be1"]), 0.0)
    h = jnp.maximum(bn(h @ raw["w2"] + raw["b2"], raw["g2"], raw["be2"]), 0.0)
    return jax.nn.sigmoid(h @ raw["w3"] + raw["b3"])


if __name__ == "__main__":
    key = jax.random.PRNGKey(0)
    k_x, k_p = jax.random.split(key)

    B = 8  # small batch (>1 required for BatchNorm batch statistics)
    x = jax.random.normal(k_x, (B, N_FEATURES), dtype=jnp.float32)
    raw, packed = init_params(k_p)

    out = linear_model_forward(x, packed)
    jax.block_until_ready(out)

    assert out.shape == (B, OUT) and out.dtype == jnp.float32
    assert bool(jnp.all((out > 0.0) & (out < 1.0)))

    ref = reference_forward(x, raw)
    assert bool(jnp.allclose(out, ref, atol=1e-5, rtol=1e-5)), (
        f"max abs diff {float(jnp.max(jnp.abs(out - ref)))}")

    print("KERNEL_OK")
</pallas_src>

<mosaic_0001>
module attributes {stable_mosaic.version = 11 : i64} {
  func.func @linear_model_kernel(%arg0: memref<8x32xf32, #tpu.memory_space<vmem>>, %arg1: memref<168x128xf32, #tpu.memory_space<vmem>>, %arg2: memref<8x1xf32, #tpu.memory_space<vmem>>) attributes {dimension_semantics = [], scalar_prefetch = 0 : i64, scratch_operands = 0 : i64, tpu.core_type = #tpu.core_type<tc>} {
    %c0 = arith.constant 0 : index
    %c0_0 = arith.constant 0 : index
    %0 = vector.load %arg0[%c0, %c0_0] : memref<8x32xf32, #tpu.memory_space<vmem>>, vector<8x32xf32>
    %c0_1 = arith.constant 0 : index
    %c0_2 = arith.constant 0 : index
    %1 = vector.load %arg1[%c0_1, %c0_2] : memref<168x128xf32, #tpu.memory_space<vmem>>, vector<32x128xf32>
    %c32 = arith.constant 32 : index
    %c0_3 = arith.constant 0 : index
    %2 = vector.load %arg1[%c32, %c0_3] : memref<168x128xf32, #tpu.memory_space<vmem>>, vector<128x128xf32>
    %c160 = arith.constant 160 : index
    %c0_4 = arith.constant 0 : index
    %3 = vector.load %arg1[%c160, %c0_4] : memref<168x128xf32, #tpu.memory_space<vmem>>, vector<8x128xf32>
    %4 = vector.extract_strided_slice %3 {offsets = [0, 0], sizes = [1, 128], strides = [1, 1]} : vector<8x128xf32> to vector<1x128xf32>
    %5 = vector.extract_strided_slice %3 {offsets = [1, 0], sizes = [1, 128], strides = [1, 1]} : vector<8x128xf32> to vector<1x128xf32>
    %6 = vector.extract_strided_slice %3 {offsets = [2, 0], sizes = [1, 128], strides = [1, 1]} : vector<8x128xf32> to vector<1x128xf32>
    %7 = vector.extract_strided_slice %3 {offsets = [3, 0], sizes = [1, 128], strides = [1, 1]} : vector<8x128xf32> to vector<1x128xf32>
    %8 = vector.extract_strided_slice %3 {offsets = [4, 0], sizes = [1, 128], strides = [1, 1]} : vector<8x128xf32> to vector<1x128xf32>
    %9 = vector.extract_strided_slice %3 {offsets = [5, 0], sizes = [1, 1], strides = [1, 1]} : vector<8x128xf32> to vector<1x1xf32>
    %cst = arith.constant dense<0.000000e+00> : vector<8x128xf32>
    %10 = tpu.matmul %0, %1, %cst {dimension_numbers = #tpu.dot_dimension_numbers<[1], [0], [0], [1], [0, 0, 1, 1], [], []>} : vector<8x32xf32>, vector<32x128xf32>, vector<8x128xf32> -> vector<8x128xf32>
    %cst_5 = arith.constant dense<0.000000e+00> : vector<128xf32>
    %11 = vector.multi_reduction <add>, %10, %cst_5 [0] : vector<8x128xf32> to vector<128xf32>
    %12 = vector.shape_cast %11 : vector<128xf32> to vector<1x128xf32>
    %cst_6 = arith.constant 8.000000e+00 : f32
    %13 = vector.broadcast %cst_6 : f32 to vector<1x128xf32>
    %14 = arith.divf %12, %13 : vector<1x128xf32>
    %15 = arith.mulf %10, %10 : vector<8x128xf32>
    %cst_7 = arith.constant dense<0.000000e+00> : vector<128xf32>
    %16 = vector.multi_reduction <add>, %15, %cst_7 [0] : vector<8x128xf32> to vector<128xf32>
    %17 = vector.shape_cast %16 : vector<128xf32> to vector<1x128xf32>
    %cst_8 = arith.constant 8.000000e+00 : f32
    %18 = vector.broadcast %cst_8 : f32 to vector<1x128xf32>
    %19 = arith.divf %17, %18 : vector<1x128xf32>
    %20 = arith.mulf %14, %14 : vector<1x128xf32>
    %21 = arith.subf %19, %20 : vector<1x128xf32>
    %cst_9 = arith.constant 9.99999974E-6 : f32
    %22 = vector.broadcast %cst_9 : f32 to vector<1x128xf32>
    %23 = arith.addf %21, %22 : vector<1x128xf32>
    %24 = math.rsqrt %23 : vector<1x128xf32>
    %25 = arith.mulf %24, %4 : vector<1x128xf32>
    %26 = arith.mulf %14, %25 : vector<1x128xf32>
    %27 = arith.subf %5, %26 : vector<1x128xf32>
    %28 = vector.broadcast %25 : vector<1x128xf32> to vector<8x128xf32>
    %29 = arith.mulf %10, %28 : vector<8x128xf32>
    %30 = vector.broadcast %27 : vector<1x128xf32> to vector<8x128xf32>
    %31 = arith.addf %29, %30 : vector<8x128xf32>
    %cst_10 = arith.constant 0.000000e+00 : f32
    %32 = vector.broadcast %cst_10 : f32 to vector<8x128xf32>
    %33 = arith.maximumf %31, %32 : vector<8x128xf32>
    %cst_11 = arith.constant dense<0.000000e+00> : vector<8x128xf32>
    %34 = tpu.matmul %33, %2, %cst_11 {dimension_numbers = #tpu.dot_dimension_numbers<[1], [0], [0], [1], [0, 0, 1, 1], [], []>} : vector<8x128xf32>, vector<128x128xf32>, vector<8x128xf32> -> vector<8x128xf32>
    %cst_12 = arith.constant dense<0.000000e+00> : vector<128xf32>
    %35 = vector.multi_reduction <add>, %34, %cst_12 [0] : vector<8x128xf32> to vector<128xf32>
    %36 = vector.shape_cast %35 : vector<128xf32> to vector<1x128xf32>
    %cst_13 = arith.constant 8.000000e+00 : f32
    %37 = vector.broadcast %cst_13 : f32 to vector<1x128xf32>
    %38 = arith.divf %36, %37 : vector<1x128xf32>
    %39 = arith.mulf %34, %34 : vector<8x128xf32>
    %cst_14 = arith.constant dense<0.000000e+00> : vector<128xf32>
    %40 = vector.multi_reduction <add>, %39, %cst_14 [0] : vector<8x128xf32> to vector<128xf32>
    %41 = vector.shape_cast %40 : vector<128xf32> to vector<1x128xf32>
    %cst_15 = arith.constant 8.000000e+00 : f32
    %42 = vector.broadcast %cst_15 : f32 to vector<1x128xf32>
    %43 = arith.divf %41, %42 : vector<1x128xf32>
    %44 = arith.mulf %38, %38 : vector<1x128xf32>
    %45 = arith.subf %43, %44 : vector<1x128xf32>
    %cst_16 = arith.constant 9.99999974E-6 : f32
    %46 = vector.broadcast %cst_16 : f32 to vector<1x128xf32>
    %47 = arith.addf %45, %46 : vector<1x128xf32>
    %48 = math.rsqrt %47 : vector<1x128xf32>
    %49 = arith.mulf %48, %6 : vector<1x128xf32>
    %50 = arith.mulf %38, %49 : vector<1x128xf32>
    %51 = arith.subf %7, %50 : vector<1x128xf32>
    %52 = vector.broadcast %49 : vector<1x128xf32> to vector<8x128xf32>
    %53 = arith.mulf %34, %52 : vector<8x128xf32>
    %54 = vector.broadcast %51 : vector<1x128xf32> to vector<8x128xf32>
    %55 = arith.addf %53, %54 : vector<8x128xf32>
    %cst_17 = arith.constant 0.000000e+00 : f32
    %56 = vector.broadcast %cst_17 : f32 to vector<8x128xf32>
    %57 = arith.maximumf %55, %56 : vector<8x128xf32>
    %58 = vector.broadcast %8 : vector<1x128xf32> to vector<8x128xf32>
    %59 = arith.mulf %57, %58 : vector<8x128xf32>
    %cst_18 = arith.constant dense<0.000000e+00> : vector<8xf32>
    %60 = vector.multi_reduction <add>, %59, %cst_18 [1] : vector<8x128xf32> to vector<8xf32>
    %61 = vector.shape_cast %60 : vector<8xf32> to vector<8x1xf32>
    %62 = vector.broadcast %9 : vector<1x1xf32> to vector<8x1xf32>
    %63 = arith.addf %61, %62 : vector<8x1xf32>
    %64 = arith.negf %63 : vector<8x1xf32>
    %65 = math.exp %64 : vector<8x1xf32>
    %cst_19 = arith.constant 1.000000e+00 : f32
    %66 = vector.broadcast %cst_19 : f32 to vector<8x1xf32>
    %67 = arith.addf %66, %65 : vector<8x1xf32>
    %68 = arith.divf %66, %67 : vector<8x1xf32>
    %c0_20 = arith.constant 0 : index
    %c0_21 = arith.constant 0 : index
    %69 = vector.load %arg2[%c0_20, %c0_21] : memref<8x1xf32, #tpu.memory_space<vmem>>, vector<8x1xf32>
    tpu.vector_store %arg2[%c0_20, %c0_21], %68 {strides = array<i32>} : memref<8x1xf32, #tpu.memory_space<vmem>>, vector<8x1xf32>,
    return
  }
}

</mosaic_0001>

<llo_original>
// kernel: linear_model_forward.1
$region0: #{linear_model_forward.1}
  #allocation0 [shape = 'u32[]', space=smem, size = 0x4, offset = 0x4, fixed_abs, tag = 'smem constant byte address 0x4 - core index']
  #allocation1 [shape = 'u32[144,128]{1,0:T(1,128)}', space=vmem, size = 0x12000, scoped, tag = 'internal scratch']
  %s0 = inlined_call_operand.hbm [shape: f32[8,32], index: 0, kind: input, shape index: {}]
  %s1 = inlined_call_operand.hbm [shape: f32[168,128], index: 1, kind: input, shape index: {}]
  %s2 = inlined_call_operand.vmem [shape: f32[8,1], index: 2, kind: output, shape index: {}]
  %s3 = sld [smem:[#allocation0]]
  $region26: #{linear_model_forward.1} parent=0
    _
  %s5 = ssub.s32 1, %s3
  %s6 = scalar_select 0, %s5, %s3
  $region1: #{linear_model_forward.1} parent=0
    #allocation2 [shape = 'u8[4096]{0}', space=vmem, size = 0x1000, scoped, tag = 'input window, operand 0, single buffered']
    #allocation3 [shape = 's32[1]{0}', space=sflag, size = 0x4, scoped, tag = 'scoped memory for linear_model_forward.1']
    #allocation4 [shape = 'u8[86016]{0}', space=vmem, size = 0x15000, scoped, tag = 'input window, operand 1, single buffered']
    #allocation5 [shape = 's32[1]{0}', space=sflag, size = 0x4, scoped, tag = 'scoped memory for linear_model_forward.1']
    %7 = vsyncpa [#allocation3], 0
    %8 = vsyncpa [#allocation5], 0
    // Predicated region
    $region2: #{linear_model_forward.1} parent=1 // pred_check
      _
    $region3: #{linear_model_forward.1} parent=1 // pred_check_branch
      %10 = sbr.rel (0) target = $region5
    $region4: #{linear_model_forward.1} parent=1 // pred_region
      %s12 = ssub.s32 128, 128
      %13 = vsyncadd [#allocation3], %s12
      %s15 = sshll.u32 [#allocation2], 4
      %s16 = int_to_ptr.vmem [resolvable:$true] %s15
      %18 = dma.hbm_to_vmem [thread:$0]  %s0, 128, %s16, [#allocation3]
    $region5: #{linear_model_forward.1} parent=1 // pred_fallthru
      _
    // Predicated region
    $region6: #{linear_model_forward.1} parent=1 // pred_check
      _
    $region7: #{linear_model_forward.1} parent=1 // pred_check_branch
      %20 = sbr.rel (0) target = $region9
    $region8: #{linear_model_forward.1} parent=1 // pred_region
      %s22 = ssub.s32 2688, 2688
      %23 = vsyncadd [#allocation5], %s22
      %s24 = sshll.u32 [#allocation4], 4
      %s25 = int_to_ptr.vmem [resolvable:$true] %s24
      %30 = dma.hbm_to_vmem [thread:$0]  %s1, 2688, %s25, [#allocation5], 128, 128, 8
    $region9: #{linear_model_forward.1} parent=1 // pred_fallthru
      _
    // Predicated region
    $region10: #{linear_model_forward.1} parent=1 // pred_check
      _
    $region11: #{linear_model_forward.1} parent=1 // pred_check_branch
      %32 = sbr.rel (0) target = $region13
    $region12: #{linear_model_forward.1} parent=1 // pred_region
      %33 = dma.done [#allocation3], 128
    $region13: #{linear_model_forward.1} parent=1 // pred_fallthru
      _
    // Predicated region
    $region14: #{linear_model_forward.1} parent=1 // pred_check
      _
    $region15: #{linear_model_forward.1} parent=1 // pred_check_branch
      %35 = sbr.rel (0) target = $region17
    $region16: #{linear_model_forward.1} parent=1 // pred_region
      %36 = dma.done [#allocation5], 2688
    $region17: #{linear_model_forward.1} parent=1 // pred_fallthru
      _
    %v37 = vld [vmem:[#allocation2] sm:$0xff]
    %v38 = vld [vmem:[#allocation4] sm:$0xff]
    %v39 = vld [vmem:[#allocation4 + $0x8] sm:$0xff]
    %v40 = vld [vmem:[#allocation4 + $0x10] sm:$0xff]
    %v41 = vld [vmem:[#allocation4 + $0x18] sm:$0xff]
    %v42 = vld [vmem:[#allocation4 + $0x20] sm:$0xff]
    %v43 = vld [vmem:[#allocation4 + $0x28] sm:$0xff]
    %v44 = vld [vmem:[#allocation4 + $0x30] sm:$0xff]
    %v45 = vld [vmem:[#allocation4 + $0x38] sm:$0xff]
    %v46 = vld [vmem:[#allocation4 + $0x40] sm:$0xff]
    %v47 = vld [vmem:[#allocation4 + $0x48] sm:$0xff]
    %v48 = vld [vmem:[#allocation4 + $0x50] sm:$0xff]
    %v49 = vld [vmem:[#allocation4 + $0x58] sm:$0xff]
    %v50 = vld [vmem:[#allocation4 + $0x60] sm:$0xff]
    %v51 = vld [vmem:[#allocation4 + $0x68] sm:$0xff]
    %v52 = vld [vmem:[#allocation4 + $0x70] sm:$0xff]
    %v53 = vld [vmem:[#allocation4 + $0x78] sm:$0xff]
    %v54 = vld [vmem:[#allocation4 + $0x80] sm:$0xff]
    %v55 = vld [vmem:[#allocation4 + $0x88] sm:$0xff]
    %v56 = vld [vmem:[#allocation4 + $0x90] sm:$0xff]
    %v57 = vld [vmem:[#allocation4 + $0x98] sm:$0xff]
    %v58 = vld [vmem:[#allocation4 + $0xa0] sm:$0xff]
    %vm59 = vcmask 261120
    %v61 = vsel %vm59, %v37, 0
    %63 = vmatprep.subr.mxu0 0.0
    %64 = vmatpush1.msra.mxu0 %v38
    %65 = vmatprep.subr.mxu0 0.0
    %66 = vmatpush1.msra.mxu0 %v39
    %67 = vmatprep.subr.mxu0 0.0
    %68 = vmatpush1.msra.mxu0 %v40
    %69 = vmatprep.subr.mxu0 0.0
    %70 = vmatpush1.msra.mxu0 %v41
    %71 = vmatprep.subr.mxu0 0.0
    %72 = vmatpush1.msra.mxu0 0.0
    %73 = vmatprep.subr.mxu0 0.0
    %74 = vmatpush1.msra.mxu0 0.0
    %75 = vmatprep.subr.mxu0 0.0
    %76 = vmatpush1.msra.mxu0 0.0
    %77 = vmatprep.subr.mxu0 0.0
    %78 = vmatpush1.msra.mxu0 0.0
    %79 = vmatprep.subr.mxu0 0.0
    %80 = vmatpush1.msra.mxu0 0.0
    %81 = vmatprep.subr.mxu0 0.0
    %82 = vmatpush1.msra.mxu0 0.0
    %83 = vmatprep.subr.mxu0 0.0
    %84 = vmatpush1.msra.mxu0 0.0
    %85 = vmatprep.subr.mxu0 0.0
    %86 = vmatpush1.msra.mxu0 0.0
    %87 = vmatprep.subr.mxu0 0.0
    %88 = vmatpush1.msra.mxu0 0.0
    %89 = vmatprep.subr.mxu0 0.0
    %90 = vmatpush1.msra.mxu0 0.0
    %91 = vmatprep.subr.mxu0 0.0
    %92 = vmatpush1.msra.mxu0 0.0
    %93 = vmatprep.subr.mxu0 0.0
    %94 = vmatpush1.msra.mxu0 0.0
    %95 = vmatprep.subr.mxu0 0.0
    %96 = vmatpush1.msra.mxu0 0.0
    %97 = vmatprep.subr.mxu0 0.0
    %98 = vmatpush1.msra.mxu0 0.0
    %99 = vmatprep.subr.mxu0 0.0
    %100 = vmatpush1.msra.mxu0 0.0
    %101 = vmatprep.subr.mxu0 0.0
    %102 = vmatpush1.msra.mxu0 0.0
    %103 = vmatprep.subr.mxu0 0.0
    %104 = vmatpush1.msra.mxu0 0.0
    %105 = vmatprep.subr.mxu0 0.0
    %106 = vmatpush1.msra.mxu0 0.0
    %107 = vmatprep.subr.mxu0 0.0
    %108 = vmatpush1.msra.mxu0 0.0
    %109 = vmatprep.subr.mxu0 0.0
    %110 = vmatpush1.msra.mxu0 0.0
    %111 = vmatprep.subr.mxu0 0.0
    %112 = vmatpush1.msra.mxu0 0.0
    %113 = vmatprep.subr.mxu0 0.0
    %114 = vmatpush1.msra.mxu0 0.0
    %115 = vmatprep.subr.mxu0 0.0
    %116 = vmatpush1.msra.mxu0 0.0
    %117 = vmatprep.subr.mxu0 0.0
    %118 = vmatpush1.msra.mxu0 0.0
    %119 = vmatprep.subr.mxu0 0.0
    %120 = vmatpush1.msra.mxu0 0.0
    %121 = vmatprep.subr.mxu0 0.0
    %122 = vmatpush1.msra.mxu0 0.0
    %123 = vmatprep.subr.mxu0 0.0
    %124 = vmatpush1.msra.mxu0 0.0
    %125 = vmatprep.subr.mxu0 0.0
    %126 = vmatpush1.msra.mxu0 0.0
    %127 = vmatprep.mubr.f32.mxu0 0.0
    %128 = vmatmul.mubr.f32.gmra.mrb[0].mxu0 %v61
    %v129 = vpop.f32.mrb[0].mxu0
    %v130 = vadd.f32 0.0, %v129
    %v131 = vpop.f32.mrb[0].mxu0
    %132 = vdwg.mxu0
    %v133 = vrot.slane %v130, 4
    %v134 = vadd.f32 %v130, %v133
    %v135 = vrot.slane %v134, 2
    %v136 = vadd.f32 %v134, %v135
    %v137 = vrot.slane %v136, 1
    %v138 = vadd.f32 %v136, %v137
    %v139 = vrcp.pop 8.0
    %v140 = vmul.f32 %v138, %v139
    %v141 = vmul.f32 %v130, %v130
    %v142 = vrot.slane %v141, 4
    %v143 = vadd.f32 %v141, %v142
    %v144 = vrot.slane %v143, 2
    %v145 = vadd.f32 %v143, %v144
    %v146 = vrot.slane %v145, 1
    %v147 = vadd.f32 %v145, %v146
    %v148 = vmul.f32 %v147, %v139
    %v149 = vmul.f32 %v140, %v140
    %v150 = vsub.f32 %v148, %v149
    %v151 = vadd.f32 %v150, 1e-05
    %v152 = vrsqrt.pop %v151
    %v153 = vmul.f32 %v152, %v58
    %v154 = vmul.f32 %v140, %v153
    %v156 = vrot.slane %v154, 7
    %v158 = vsub.f32 %v58, %v156
    %v159 = vlaneseq
    %v160 = vshrl.u32 %v159, 7
    %v161 = vsub.s32 0, %v160
    %v162 = vrot.slane %v153, %v161
    %v163 = vmul.f32 %v130, %v162
    %v164 = vlaneseq
    %v165 = vshrl.u32 %v164, 7
    %v166 = vsub.s32 1, %v165
    %v167 = vrot.slane %v158, %v166
    %v168 = vadd.f32 %v163, %v167
    %v169 = vmax.f32 %v168, 0.0
    %170 = vmatprep.subr.mxu0 0.0
    %171 = vmatpush1.msra.mxu0 %v42
    %172 = vmatprep.subr.mxu0 0.0
    %173 = vmatpush1.msra.mxu0 %v43
    %174 = vmatprep.subr.mxu0 0.0
    %175 = vmatpush1.msra.mxu0 %v44
    %176 = vmatprep.subr.mxu0 0.0
    %177 = vmatpush1.msra.mxu0 %v45
    %178 = vmatprep.subr.mxu0 0.0
    %179 = vmatpush1.msra.mxu0 %v46
    %180 = vmatprep.subr.mxu0 0.0
    %181 = vmatpush1.msra.mxu0 %v47
    %182 = vmatprep.subr.mxu0 0.0
    %183 = vmatpush1.msra.mxu0 %v48
    %184 = vmatprep.subr.mxu0 0.0
    %185 = vmatpush1.msra.mxu0 %v49
    %186 = vmatprep.subr.mxu0 0.0
    %187 = vmatpush1.msra.mxu0 %v50
    %188 = vmatprep.subr.mxu0 0.0
    %189 = vmatpush1.msra.mxu0 %v51
    %190 = vmatprep.subr.mxu0 0.0
    %191 = vmatpush1.msra.mxu0 %v52
    %192 = vmatprep.subr.mxu0 0.0
    %193 = vmatpush1.msra.mxu0 %v53
    %194 = vmatprep.subr.mxu0 0.0
    %195 = vmatpush1.msra.mxu0 %v54
    %196 = vmatprep.subr.mxu0 0.0
    %197 = vmatpush1.msra.mxu0 %v55
    %198 = vmatprep.subr.mxu0 0.0
    %199 = vmatpush1.msra.mxu0 %v56
    %200 = vmatprep.subr.mxu0 0.0
    %201 = vmatpush1.msra.mxu0 %v57
    %202 = vmatprep.subr.mxu0 0.0
    %203 = vmatpush1.msra.mxu0 0.0
    %204 = vmatprep.subr.mxu0 0.0
    %205 = vmatpush1.msra.mxu0 0.0
    %206 = vmatprep.subr.mxu0 0.0
    %207 = vmatpush1.msra.mxu0 0.0
    %208 = vmatprep.subr.mxu0 0.0
    %209 = vmatpush1.msra.mxu0 0.0
    %210 = vmatprep.subr.mxu0 0.0
    %211 = vmatpush1.msra.mxu0 0.0
    %212 = vmatprep.subr.mxu0 0.0
    %213 = vmatpush1.msra.mxu0 0.0
    %214 = vmatprep.subr.mxu0 0.0
    %215 = vmatpush1.msra.mxu0 0.0
    %216 = vmatprep.subr.mxu0 0.0
    %217 = vmatpush1.msra.mxu0 0.0
    %218 = vmatprep.subr.mxu0 0.0
    %219 = vmatpush1.msra.mxu0 0.0
    %220 = vmatprep.subr.mxu0 0.0
    %221 = vmatpush1.msra.mxu0 0.0
    %222 = vmatprep.subr.mxu0 0.0
    %223 = vmatpush1.msra.mxu0 0.0
    %224 = vmatprep.subr.mxu0 0.0
    %225 = vmatpush1.msra.mxu0 0.0
    %226 = vmatprep.subr.mxu0 0.0
    %227 = vmatpush1.msra.mxu0 0.0
    %228 = vmatprep.subr.mxu0 0.0
    %229 = vmatpush1.msra.mxu0 0.0
    %230 = vmatprep.subr.mxu0 0.0
    %231 = vmatpush1.msra.mxu0 0.0
    %232 = vmatprep.subr.mxu0 0.0
    %233 = vmatpush1.msra.mxu0 0.0
    %234 = vmatprep.mubr.f32.mxu0 0.0
    %235 = vmatmul.mubr.f32.gmra.mrb[0].mxu0 %v169
    %v236 = vpop.f32.mrb[0].mxu0
    %v237 = vadd.f32 0.0, %v236
    %v238 = vpop.f32.mrb[0].mxu0
    %239 = vdwg.mxu0
    %v240 = vrot.slane %v237, 4
    %v241 = vadd.f32 %v237, %v240
    %v242 = vrot.slane %v241, 2
    %v243 = vadd.f32 %v241, %v242
    %v244 = vrot.slane %v243, 1
    %v245 = vadd.f32 %v243, %v244
    %v246 = vmul.f32 %v245, %v139
    %v247 = vmul.f32 %v237, %v237
    %v248 = vrot.slane %v247, 4
    %v249 = vadd.f32 %v247, %v248
    %v250 = vrot.slane %v249, 2
    %v251 = vadd.f32 %v249, %v250
    %v252 = vrot.slane %v251, 1
    %v253 = vadd.f32 %v251, %v252
    %v254 = vmul.f32 %v253, %v139
    %v255 = vmul.f32 %v246, %v246
    %v256 = vsub.f32 %v254, %v255
    %v257 = vadd.f32 %v256, 1e-05
    %v258 = vrsqrt.pop %v257
    %v259 = vmul.f32 %v258, %v58
    %v260 = vmul.f32 %v246, %v259
    %v262 = vrot.slane %v260, 7
    %v264 = vsub.f32 %v58, %v262
    %v265 = vlaneseq
    %v266 = vshrl.u32 %v265, 7
    %v267 = vsub.s32 2, %v266
    %v268 = vrot.slane %v259, %v267
    %v269 = vmul.f32 %v237, %v268
    %v270 = vlaneseq
    %v271 = vshrl.u32 %v270, 7
    %v272 = vsub.s32 3, %v271
    %v273 = vrot.slane %v264, %v272
    %v274 = vadd.f32 %v269, %v273
    %v275 = vmax.f32 %v274, 0.0
    %v276 = vlaneseq
    %v277 = vshrl.u32 %v276, 7
    %v278 = vsub.s32 4, %v277
    %v279 = vrot.slane %v58, %v278
    %v280 = vmul.f32 %v275, %v279
    %281 = vadd.xlane.f32.xlu0 %v280
    %v282 = vpop.xlane.xlu0 %281
    %v283 = vlaneseq
    %v284 = vshrl.u32 %v283, 7
    %v285 = vsub.s32 5, %v284
    %v286 = vrot.slane %v58, %v285
    %v287 = vadd.f32 %v282, %v286
    %v288 = vxor.u32 %v287, 2147483648
    %v289 = vmul.f32 %v288, 1.442695
    %v290 = vpow.pop %v289
    %v291 = vadd.f32 %v290, 1.0
    %v292 = vrcp.pop %v291
    %v293 = vmul.f32 1.0, %v292
    %vm294 = vcmask 7168
    %295 = vst.msk [vmem:[%s2] sm:$0xff] %vm294, %v293
    // Predicated region
    $region18: #{linear_model_forward.1} parent=1 // pred_check
      _
    $region19: #{linear_model_forward.1} parent=1 // pred_check_branch
      %297 = sbr.rel (0) target = $region21
    $region20: #{linear_model_forward.1} parent=1 // pred_region
      _
    $region21: #{linear_model_forward.1} parent=1 // pred_fallthru
      _
    // Predicated region
    $region22: #{linear_model_forward.1} parent=1 // pred_check
      _
    $region23: #{linear_model_forward.1} parent=1 // pred_check_branch
      %299 = sbr.rel (0) target = $region25
    $region24: #{linear_model_forward.1} parent=1 // pred_region
      _
    $region25: #{linear_model_forward.1} parent=1 // pred_fallthru
      _
    %300 = vsyncpa [#allocation3], 1
    %301 = vsyncpa [#allocation5], 1

</llo_original>
